<compile_context>
chip_gen: v7x
topology: tpu7x:2x2x1
jax: 0.10.0
libtpu: 0.0.40
codegen_flags: <defaults>
</compile_context>

<pallas_src>
import functools

import jax
import jax.numpy as jnp
from jax.experimental import pallas as pl
from jax.experimental.pallas import tpu as pltpu

_LANES = 128
_MAX_TILE_ROWS = 1024  # 1024 x 128 x 4B = 512 KiB per f32 tile buffer


def _fsq_tile_kernel(scale_ref, z_ref, qz_ref, psum_ref, *, bound_levels):
    """Elementwise FSQ on one (tile_rows, 128) tile + (8,128) MSE partials."""
    temp = scale_ref[0]
    inv_temp = scale_ref[1]

    z = z_ref[...]                                      # (tile_rows, 128) f32
    bounded = bound_levels * jnp.tanh(z * inv_temp)     # EUP tanh + VPU mul
    q = jnp.round(bounded) * temp                       # round-half-to-even
    qz_ref[...] = q

    diff = z - q
    sq = diff * diff
    tile_rows = z.shape[0]                              # static (block shape)
    # (tile_rows, 128) -> (tile_rows//8, 8, 128) is a no-op vreg re-labeling;
    # the axis-0 sum is cross-vreg elementwise adds (no XLU reduction).
    psum_ref[...] = jnp.sum(sq.reshape(tile_rows // 8, 8, _LANES), axis=0)


def fsq_forward(z, codebook, temperature, num_levels):
    """Pallas FSQ forward (eval mode). Returns (quantized_z, total_loss).

    The codebook only feeds the assignment / training-time buffer-update path,
    whose result is discarded by forward(); it is not used here.
    """
    del codebook  # unused in the eval-mode forward value (see note above)

    orig_shape = z.shape
    total = int(z.size)
    bound_levels = float(int(num_levels / 2))

    # Lane-dense packing: the elementwise path ignores row boundaries.
    rows = int(pl.cdiv(total, _LANES))
    if rows >= _MAX_TILE_ROWS:
        tile_rows = _MAX_TILE_ROWS
    else:
        tile_rows = int(pl.cdiv(rows, 8) * 8)           # sublane multiple
    grid = int(pl.cdiv(rows, tile_rows))
    padded = grid * tile_rows * _LANES

    zf = z.reshape(-1).astype(jnp.float32)
    if padded != total:
        # Zero padding quantizes to 0 -> contributes 0 to the MSE sum.
        zf = jnp.pad(zf, (0, padded - total))
    zf = zf.reshape(grid * tile_rows, _LANES)

    temp_f = float(temperature)
    scales = jnp.array([temp_f, 1.0 / temp_f], dtype=jnp.float32)

    kernel = functools.partial(_fsq_tile_kernel, bound_levels=bound_levels)

    qz, psum = pl.pallas_call(
        kernel,
        grid=(grid,),
        in_specs=[
            pl.BlockSpec(memory_space=pltpu.MemorySpace.SMEM),    # [temp, 1/temp]
            pl.BlockSpec((tile_rows, _LANES), lambda i: (i, 0)),  # z tile
        ],
        out_specs=[
            pl.BlockSpec((tile_rows, _LANES), lambda i: (i, 0)),  # quantized tile
            pl.BlockSpec((8, _LANES), lambda i: (i, 0)),          # MSE partials
        ],
        out_shape=(
            jax.ShapeDtypeStruct((grid * tile_rows, _LANES), jnp.float32),
            jax.ShapeDtypeStruct((grid * 8, _LANES), jnp.float32),
        ),
        compiler_params=pltpu.CompilerParams(
            dimension_semantics=("parallel",),
            vmem_limit_bytes=32 * 1024 * 1024,
        ),
    )(scales, zf)

    quantized_z = qz.reshape(-1)[:total].reshape(orig_shape).astype(z.dtype)

    # Finalize the loss on the tiny per-tile partials (global count, not tile).
    mse = jnp.sum(psum) / float(total)
    commitment_loss = mse / temp_f
    codebook_loss = mse / temp_f
    entropy_loss = jnp.float32(-0.0)   # usage_count buffer is all-zeros at init
    total_loss = commitment_loss + codebook_loss + entropy_loss
    return quantized_z, total_loss


if __name__ == "__main__":
    num_levels = 10
    embedding_dim = 64
    temperature = 1.0

    key = jax.random.PRNGKey(0)
    k_cb, k_z = jax.random.split(key)

    # Matches nn.Parameter(torch.randn(L, D) * 0.1) in shape/scale.
    codebook = jax.random.normal(k_cb, (num_levels, embedding_dim),
                                 dtype=jnp.float32) * 0.1
    # Encoder output: batch=2, seq=8, hidden=embedding_dim.
    z = jax.random.normal(k_z, (2, 8, embedding_dim), dtype=jnp.float32)

    quantized_z, total_loss = fsq_forward(z, codebook, temperature, num_levels)
    jax.block_until_ready((quantized_z, total_loss))

    assert quantized_z.shape == z.shape
    assert total_loss.shape == ()

    # Pure-JAX reference (eval-mode forward); ignore elements whose bounded
    # value sits on a round() tie boundary (tanh ULP differences could flip).
    bound_levels = float(int(num_levels / 2))
    bounded_ref = bound_levels * jnp.tanh(z / temperature)
    q_ref = jnp.round(bounded_ref) * temperature
    mse_ref = jnp.mean((z - q_ref) ** 2)
    loss_ref = 2.0 * mse_ref / temperature
    away_from_tie = jnp.abs(bounded_ref - jnp.floor(bounded_ref) - 0.5) > 1e-3
    assert bool(jnp.all(jnp.where(away_from_tie,
                                  jnp.abs(quantized_z - q_ref) < 1e-4, True)))
    assert abs(float(total_loss) - float(loss_ref)) < 2e-2 * max(1.0, float(loss_ref))
    print("KERNEL_OK")
</pallas_src>

<mosaic_0001>
module attributes {stable_mosaic.version = 11 : i64} {
  func.func @_fsq_tile_kernel(%arg0: i32, %arg1: memref<2xf32, #tpu.memory_space<smem>>, %arg2: memref<8x128xf32, #tpu.memory_space<vmem>>, %arg3: memref<8x128xf32, #tpu.memory_space<vmem>>, %arg4: memref<8x128xf32, #tpu.memory_space<vmem>>) attributes {dimension_semantics = [#tpu.dimension_semantics<parallel>], iteration_bounds = array<i64: 1>, scalar_prefetch = 0 : i64, scratch_operands = 0 : i64, tpu.core_type = #tpu.core_type<tc>, window_params = [{transform_indices = @transform_0, window_bounds = array<i64: 2>}, {transform_indices = @transform_1, window_bounds = array<i64: 8, 128>}, {transform_indices = @transform_2, window_bounds = array<i64: 8, 128>}, {transform_indices = @transform_3, window_bounds = array<i64: 8, 128>}]} {
    %c0 = arith.constant 0 : index
    %0 = memref.load %arg1[%c0] : memref<2xf32, #tpu.memory_space<smem>>
    %c1 = arith.constant 1 : index
    %1 = memref.load %arg1[%c1] : memref<2xf32, #tpu.memory_space<smem>>
    %c0_0 = arith.constant 0 : index
    %c0_1 = arith.constant 0 : index
    %2 = vector.load %arg2[%c0_0, %c0_1] : memref<8x128xf32, #tpu.memory_space<vmem>>, vector<8x128xf32>
    %3 = vector.broadcast %1 : f32 to vector<8x128xf32>
    %4 = arith.mulf %2, %3 : vector<8x128xf32>
    %5 = math.tanh %4 : vector<8x128xf32>
    %cst = arith.constant 5.000000e+00 : f32
    %6 = vector.broadcast %cst : f32 to vector<8x128xf32>
    %7 = arith.mulf %6, %5 : vector<8x128xf32>
    %8 = math.roundeven %7 : vector<8x128xf32>
    %9 = vector.broadcast %0 : f32 to vector<8x128xf32>
    %10 = arith.mulf %8, %9 : vector<8x128xf32>
    %c0_2 = arith.constant 0 : index
    %c0_3 = arith.constant 0 : index
    %11 = vector.load %arg3[%c0_2, %c0_3] : memref<8x128xf32, #tpu.memory_space<vmem>>, vector<8x128xf32>
    tpu.vector_store %arg3[%c0_2, %c0_3], %10 {strides = array<i32>} : memref<8x128xf32, #tpu.memory_space<vmem>>, vector<8x128xf32>,
    %12 = arith.subf %2, %10 : vector<8x128xf32>
    %13 = arith.mulf %12, %12 : vector<8x128xf32>
    %14 = vector.shape_cast %13 : vector<8x128xf32> to vector<1x8x128xf32>
    %cst_4 = arith.constant dense<0.000000e+00> : vector<8x128xf32>
    %15 = vector.multi_reduction <add>, %14, %cst_4 [0] : vector<1x8x128xf32> to vector<8x128xf32>
    %c0_5 = arith.constant 0 : index
    %c0_6 = arith.constant 0 : index
    %16 = vector.load %arg4[%c0_5, %c0_6] : memref<8x128xf32, #tpu.memory_space<vmem>>, vector<8x128xf32>
    tpu.vector_store %arg4[%c0_5, %c0_6], %15 {strides = array<i32>} : memref<8x128xf32, #tpu.memory_space<vmem>>, vector<8x128xf32>,
    return
  }
  func.func @transform_0(%arg0: i32) -> i32 {
    %c0_i32 = arith.constant 0 : i32
    %c0_i32_0 = arith.constant 0 : i32
    return %c0_i32 : i32
  }
  func.func @transform_1(%arg0: i32) -> (i32, i32) {
    %c0_i32 = arith.constant 0 : i32
    %c0_i32_0 = arith.constant 0 : i32
    return %arg0, %c0_i32 : i32, i32
  }
  func.func @transform_2(%arg0: i32) -> (i32, i32) {
    %c0_i32 = arith.constant 0 : i32
    %c0_i32_0 = arith.constant 0 : i32
    return %arg0, %c0_i32 : i32, i32
  }
  func.func @transform_3(%arg0: i32) -> (i32, i32) {
    %c0_i32 = arith.constant 0 : i32
    %c0_i32_0 = arith.constant 0 : i32
    return %arg0, %c0_i32 : i32, i32
  }
}

</mosaic_0001>

<llo_original>
// kernel: tpu_custom_call.1
$region0: #{tpu_custom_call.1}
  #allocation0 [shape = 'u32[]', space=smem, size = 0x4, offset = 0x4, fixed_abs, tag = 'smem constant byte address 0x4 - core index']
  #allocation1 [shape = 'u32[144,128]{1,0:T(1,128)}', space=vmem, size = 0x12000, scoped, tag = 'internal scratch']
  %s0 = inlined_call_operand.hbm [shape: f32[2], index: 0, kind: input, shape index: {}]
  %s1 = inlined_call_operand.hbm [shape: f32[8,128], index: 1, kind: input, shape index: {}]
  %s2 = inlined_call_operand.hbm [shape: f32[8,128], index: 2, kind: output, shape index: {0}]
  %s3 = inlined_call_operand.hbm [shape: f32[8,128], index: 3, kind: output, shape index: {1}]
  %4 = xla_tuple %s2, %s3
  %s5 = sld [smem:[#allocation0]]
  $region34: #{tpu_custom_call.1} parent=0
    _
  %s7 = ssub.s32 1, %s5
  %s8 = scalar_select 0, %s7, %s5
  $region1: #{tpu_custom_call.1} parent=0
    #allocation2 [shape = 'u8[512]{0}', space=smem, size = 0x200, scoped, tag = 'input window, operand 0, single buffered']
    #allocation3 [shape = 's32[1]{0}', space=sflag, size = 0x4, scoped, tag = 'scoped memory for tpu_custom_call.1']
    #allocation4 [shape = 's32[1]{0}', space=sflag, size = 0x4, scoped, tag = 'scoped memory for tpu_custom_call.1']
    #allocation5 [shape = 's32[1]{0}', space=sflag, size = 0x4, scoped, tag = 'scoped memory for tpu_custom_call.1']
    #allocation6 [shape = 'u8[4096]{0}', space=vmem, size = 0x1000, scoped, tag = 'input window, operand 1, single buffered']
    #allocation7 [shape = 'u8[4096]{0}', space=vmem, size = 0x1000, scoped, tag = 'output window, operand 0, single buffered']
    #allocation8 [shape = 'u8[4096]{0}', space=vmem, size = 0x1000, scoped, tag = 'output window, operand 1, single buffered']
    #allocation9 [shape = 's32[1]{0}', space=sflag, size = 0x4, scoped, tag = 'scoped memory for tpu_custom_call.1']
    %9 = vsyncpa [#allocation5], 0
    %10 = vsyncpa [#allocation3], 0
    %11 = vsyncpa [#allocation4], 0
    %12 = vsyncpa [#allocation9], 0
    // Predicated region
    $region2: #{tpu_custom_call.1} parent=1 // pred_check
      _
    $region3: #{tpu_custom_call.1} parent=1 // pred_check_branch
      %14 = sbr.rel (0) target = $region5
    $region4: #{tpu_custom_call.1} parent=1 // pred_region
      %s16 = ssub.s32 16, 16
      %17 = vsyncadd [#allocation5], %s16
      %20 = dma.hbm_to_smem %s0, 16, [#allocation2], [#allocation5]
    $region5: #{tpu_custom_call.1} parent=1 // pred_fallthru
      _
    // Predicated region
    $region6: #{tpu_custom_call.1} parent=1 // pred_check
      _
    $region7: #{tpu_custom_call.1} parent=1 // pred_check_branch
      %22 = sbr.rel (0) target = $region9
    $region8: #{tpu_custom_call.1} parent=1 // pred_region
      %s24 = ssub.s32 128, 128
      %25 = vsyncadd [#allocation3], %s24
      %s27 = sshll.u32 [#allocation6], 4
      %s28 = int_to_ptr.vmem [resolvable:$true] %s27
      %30 = dma.hbm_to_vmem [thread:$0]  %s1, 128, %s28, [#allocation3]
    $region9: #{tpu_custom_call.1} parent=1 // pred_fallthru
      _
    // Predicated region
    $region10: #{tpu_custom_call.1} parent=1 // pred_check
      _
    $region11: #{tpu_custom_call.1} parent=1 // pred_check_branch
      %32 = sbr.rel (0) target = $region13
    $region12: #{tpu_custom_call.1} parent=1 // pred_region
      %33 = dma.done [#allocation5], 16
    $region13: #{tpu_custom_call.1} parent=1 // pred_fallthru
      _
    // Predicated region
    $region14: #{tpu_custom_call.1} parent=1 // pred_check
      _
    $region15: #{tpu_custom_call.1} parent=1 // pred_check_branch
      %35 = sbr.rel (0) target = $region17
    $region16: #{tpu_custom_call.1} parent=1 // pred_region
      %36 = dma.done [#allocation3], 128
    $region17: #{tpu_custom_call.1} parent=1 // pred_fallthru
      _
    %37 = sfence
    %s38 = sld [smem:[#allocation2]]
    %s39 = sld [smem:[#allocation2 + $0x1]]
    %v40 = vld [vmem:[#allocation6] sm:$0xff]
    %v41 = vstv %s39
    %v42 = vmul.f32 %v40, %v41
    %v43 = vtanh.pop %v42
    %v44 = vmul.f32 %v43, 5.0
    %v45 = vround.ne.pseudo %v44
    %v46 = vstv %s38
    %v47 = vmul.f32 %v45, %v46
    %48 = vst [vmem:[#allocation7] sm:$0xff] %v47
    %v49 = vsub.f32 %v40, %v47
    %v50 = vmul.f32 %v49, %v49
    %v51 = vadd.f32 %v50, 0.0
    %52 = vst [vmem:[#allocation8] sm:$0xff] %v51
    // Predicated region
    $region18: #{tpu_custom_call.1} parent=1 // pred_check
      _
    $region19: #{tpu_custom_call.1} parent=1 // pred_check_branch
      %54 = sbr.rel (0) target = $region21
    $region20: #{tpu_custom_call.1} parent=1 // pred_region
      %s56 = ssub.s32 128, 128
      %57 = vsyncadd [#allocation4], %s56
      %s59 = sshll.u32 [#allocation7], 4
      %s60 = int_to_ptr.vmem [resolvable:$true] %s59
      %62 = dma.vmem_to_hbm [thread:$0]  %s60, 128, %s2, [#allocation4]
    $region21: #{tpu_custom_call.1} parent=1 // pred_fallthru
      _
    // Predicated region
    $region22: #{tpu_custom_call.1} parent=1 // pred_check
      _
    $region23: #{tpu_custom_call.1} parent=1 // pred_check_branch
      %64 = sbr.rel (0) target = $region25
    $region24: #{tpu_custom_call.1} parent=1 // pred_region
      %s66 = ssub.s32 128, 128
      %67 = vsyncadd [#allocation9], %s66
      %s69 = sshll.u32 [#allocation8], 4
      %s70 = int_to_ptr.vmem [resolvable:$true] %s69
      %72 = dma.vmem_to_hbm [thread:$0]  %s70, 128, %s3, [#allocation9]
    $region25: #{tpu_custom_call.1} parent=1 // pred_fallthru
      _
    // Predicated region
    $region26: #{tpu_custom_call.1} parent=1 // pred_check
      _
    $region27: #{tpu_custom_call.1} parent=1 // pred_check_branch
      %74 = sbr.rel (0) target = $region29
    $region28: #{tpu_custom_call.1} parent=1 // pred_region
      %75 = dma.done [#allocation4], 128
    $region29: #{tpu_custom_call.1} parent=1 // pred_fallthru
      _
    // Predicated region
    $region30: #{tpu_custom_call.1} parent=1 // pred_check
      _
    $region31: #{tpu_custom_call.1} parent=1 // pred_check_branch
      %77 = sbr.rel (0) target = $region33
    $region32: #{tpu_custom_call.1} parent=1 // pred_region
      %78 = dma.done [#allocation9], 128
    $region33: #{tpu_custom_call.1} parent=1 // pred_fallthru
      _
    %79 = vsyncpa [#allocation3], 1
    %80 = vsyncpa [#allocation4], 1
    %81 = vsyncpa [#allocation9], 1
    %82 = vsyncpa [#allocation5], 1

</llo_original>
